<compile_context>
chip_gen: v7x
topology: tpu7x:2x2x1
jax: 0.10.0
libtpu: 0.0.40
codegen_flags: <defaults>
</compile_context>

<pallas_src>
import jax
import jax.numpy as jnp
from jax.experimental import pallas as pl
from jax.experimental.pallas import tpu as pltpu


def _double_kernel(x_ref, o_ref):
    # residual = shortcut(x) = x ; blocks(x) = x ; out = blocks(x) + residual
    xv = x_ref[...]
    o_ref[...] = xv + xv


def _sublane_multiple(dtype):
    # Sub-32-bit dtypes pack along sublanes: f32 -> 8, bf16 -> 16, int8/fp8 -> 32.
    itemsize = jnp.dtype(dtype).itemsize
    return {4: 8, 2: 16, 1: 32}.get(itemsize, 8)


_LANE_CANDIDATES = (4096, 2048, 1024, 512, 256, 128)

# Below this, plain XLA x + x is strictly faster than a standalone pallas_call.
_MIN_PALLAS_BYTES = 1 << 20


def _target_block_bytes():
    """Per-chip block-size target (bytes) for the streaming add."""
    kind = ""
    try:
        kind = jax.devices()[0].device_kind.lower()
    except Exception:
        pass
    if "v5" in kind:
        # v5e: ~0.82 TB/s HBM, 16 MiB default scoped VMEM -> 2 MiB blocks
        # already make per-step overhead <8%, and 4 buffers = 8 MiB fits.
        return 2 << 20
    if "v6" in kind:
        # v6e: measured f32-add roofline plateaus by ~4 MiB blocks.
        return 4 << 20
    # v7x / unknown newer: 3.2 TB/s HBM makes 2 MiB steps too short vs the
    # ~0.35 us per-step overhead; use 6 MiB (4 buffers = 24 MiB).
    return 6 << 20


def _pick_tile_rows(rows, lane, itemsize, sublane, target_bytes):
    """Pick a sublane-aligned tile_rows near target_bytes, preferring a
    divisor of rows (keeps the last block full -> unmasked lane-dense stores)."""
    if rows <= sublane:
        return rows  # block dim equals full array dim (allowed)
    max_rows_aligned = (rows // sublane) * sublane
    t = target_bytes // (lane * itemsize)
    t = max(sublane, (t // sublane) * sublane)
    t = min(t, max_rows_aligned)
    if rows % t == 0:
        return t
    # Search downward (aligned steps) for a divisor, but don't shrink below
    # half the target -- a slightly ragged last block beats tiny tiles.
    cand = t
    lo = max(sublane, t // 2)
    while cand >= lo:
        if rows % cand == 0:
            return cand
        cand -= sublane
    return t


def residual_block_forward(x, in_channels, out_channels, *,
                           force_pallas=False, donate_input=False):
    """Pallas implementation of ResidualBlock.forward.

    x: (B, C, H, W) array (NCHW, matching PyTorch).  Both `blocks` and
    `shortcut` are Identity in the reference module, so the result is x + x
    regardless of should_apply_shortcut (out_channels only toggles that flag).
    """
    assert x.shape[1] == in_channels, "channel dim must match in_channels"

    orig_shape = x.shape
    dtype = x.dtype
    itemsize = jnp.dtype(dtype).itemsize
    sublane = _sublane_multiple(dtype)
    total = x.size
    total_bytes = total * itemsize

    # Fast paths: tiny inputs, or flat size not a multiple of 128 (avoids the
    # old pad+slice fallback which cost ~3x the roofline HBM traffic).
    if total % 128 != 0:
        return x + x
    if not force_pallas and total_bytes < _MIN_PALLAS_BYTES:
        return x + x

    # Choose a wide lane dimension L (multiple of 128) dividing the flat size,
    # preferring (lane, tile_rows) combinations where tile_rows divides rows.
    target_bytes = _target_block_bytes()
    best = None
    for cand in _LANE_CANDIDATES:
        if total % cand != 0:
            continue
        rows_c = total // cand
        tr_c = _pick_tile_rows(rows_c, cand, itemsize, sublane, target_bytes)
        full_last = (rows_c % tr_c == 0)
        aligned_rows = (rows_c % sublane == 0) or (rows_c == tr_c)
        key = (full_last, aligned_rows, cand)
        if best is None or key > best[0]:
            best = (key, cand, rows_c, tr_c)
    assert best is not None  # total % 128 == 0 guarantees lane=128 works
    _, lane, rows, tile_rows = best

    # v7x has 2 TensorCores: make sure the "parallel" grid axis has >= 2
    # blocks whenever the data allows it, so both TCs stream HBM.
    if pl.cdiv(rows, tile_rows) < 2 and rows >= 2 * sublane:
        half = (rows + 1) // 2
        tile_rows = max(sublane, ((half + sublane - 1) // sublane) * sublane)

    tile_bytes = tile_rows * lane * itemsize
    # 2 double-buffered inputs + 2 double-buffered outputs, plus slack; raise
    # the scoped VMEM limit so the bigger v7x blocks never trip the default.
    vmem_limit_bytes = max(32 << 20, 4 * tile_bytes + (4 << 20))

    x2d = x.reshape(rows, lane)
    grid = (pl.cdiv(rows, tile_rows),)  # ragged last block is masked by Pallas

    out2d = pl.pallas_call(
        _double_kernel,
        out_shape=jax.ShapeDtypeStruct((rows, lane), dtype),
        grid_spec=pltpu.PrefetchScalarGridSpec(
            num_scalar_prefetch=0,
            grid=grid,
            in_specs=[pl.BlockSpec((tile_rows, lane), lambda i: (i, 0))],
            out_specs=pl.BlockSpec((tile_rows, lane), lambda i: (i, 0)),
        ),
        compiler_params=pltpu.CompilerParams(
            dimension_semantics=("parallel",),
            vmem_limit_bytes=vmem_limit_bytes,
        ),
        # Optional donation: does not change HBM bytes moved but avoids a
        # second full-size HBM allocation when the caller no longer needs x.
        input_output_aliases=({0: 0} if donate_input else {}),
    )(x2d)

    return out2d.reshape(orig_shape)


if __name__ == "__main__":
    key = jax.random.PRNGKey(0)

    # Primary case, consistent with the module: NCHW (B=2, C=4, H=16, W=16).
    B, C, H, W = 2, 4, 16, 16
    in_channels, out_channels = C, C
    x = jax.random.normal(key, (B, C, H, W), dtype=jnp.float32)

    # Exercise the Pallas kernel itself on the small shape (forced)...
    out = jax.block_until_ready(
        residual_block_forward(x, in_channels, out_channels, force_pallas=True))
    ref = x + x
    assert out.shape == x.shape and out.dtype == x.dtype
    assert jnp.array_equal(out, ref)

    # ...and the auto path (small input -> plain-JAX fast path, same result).
    out_auto = jax.block_until_ready(
        residual_block_forward(x, in_channels, out_channels))
    assert jnp.array_equal(out_auto, ref)

    k1, k2, k3 = jax.random.split(key, 3)

    # Large-enough input to take the multi-block Pallas streaming path.
    xl = jax.random.normal(k1, (2, 4, 256, 256), dtype=jnp.float32)  # 2 MiB
    outl = jax.block_until_ready(residual_block_forward(xl, 4, 4))
    assert jnp.array_equal(outl, xl + xl)

    # Lane-unaligned flat size + mismatched channels
    # (should_apply_shortcut=True still gives x + x with Identity shortcut):
    # takes the plain-JAX path, no pad copies.
    x2 = jax.random.normal(k2, (2, 3, 17, 19), dtype=jnp.float32)
    out2 = jax.block_until_ready(residual_block_forward(x2, 3, 8))
    assert jnp.array_equal(out2, x2 + x2)

    # bf16 input (packed sublane handling) through the Pallas kernel.
    x3 = jax.random.normal(k3, (B, C, H, W), dtype=jnp.bfloat16)
    out3 = jax.block_until_ready(
        residual_block_forward(x3, C, C, force_pallas=True))
    assert out3.dtype == jnp.bfloat16
    assert jnp.array_equal(out3, x3 + x3)

    print("KERNEL_OK")
</pallas_src>

<mosaic_0001>
module attributes {stable_mosaic.version = 11 : i64} {
  func.func @_double_kernel(%arg0: i32, %arg1: memref<1x2048xf32, #tpu.memory_space<vmem>>, %arg2: memref<1x2048xf32, #tpu.memory_space<vmem>>) attributes {dimension_semantics = [#tpu.dimension_semantics<parallel>], iteration_bounds = array<i64: 1>, scalar_prefetch = 0 : i64, scratch_operands = 0 : i64, tpu.core_type = #tpu.core_type<tc>, window_params = [{transform_indices = @transform_0, window_bounds = array<i64: 1, 2048>}, {transform_indices = @transform_1, window_bounds = array<i64: 1, 2048>}]} {
    %c0 = arith.constant 0 : index
    %c0_0 = arith.constant 0 : index
    %0 = vector.load %arg1[%c0, %c0_0] : memref<1x2048xf32, #tpu.memory_space<vmem>>, vector<1x2048xf32>
    %1 = arith.addf %0, %0 : vector<1x2048xf32>
    %c0_1 = arith.constant 0 : index
    %c0_2 = arith.constant 0 : index
    %2 = vector.load %arg2[%c0_1, %c0_2] : memref<1x2048xf32, #tpu.memory_space<vmem>>, vector<1x2048xf32>
    tpu.vector_store %arg2[%c0_1, %c0_2], %1 {strides = array<i32>} : memref<1x2048xf32, #tpu.memory_space<vmem>>, vector<1x2048xf32>,
    return
  }
  func.func @transform_0(%arg0: i32) -> (i32, i32) {
    %c0_i32 = arith.constant 0 : i32
    %c0_i32_0 = arith.constant 0 : i32
    return %arg0, %c0_i32 : i32, i32
  }
  func.func @transform_1(%arg0: i32) -> (i32, i32) {
    %c0_i32 = arith.constant 0 : i32
    %c0_i32_0 = arith.constant 0 : i32
    return %arg0, %c0_i32 : i32, i32
  }
}

</mosaic_0001>

<llo_original>
// kernel: tpu_custom_call.1
$region0: #{tpu_custom_call.1}
  #allocation0 [shape = 'u32[]', space=smem, size = 0x4, offset = 0x4, fixed_abs, tag = 'smem constant byte address 0x4 - core index']
  #allocation1 [shape = 'u32[144,128]{1,0:T(1,128)}', space=vmem, size = 0x12000, scoped, tag = 'internal scratch']
  %s0 = inlined_call_operand.hbm [shape: f32[1,2048], index: 0, kind: input, shape index: {}]
  %s1 = inlined_call_operand.hbm [shape: f32[1,2048], index: 1, kind: output, shape index: {}]
  %s2 = sld [smem:[#allocation0]]
  $region18: #{tpu_custom_call.1} parent=0
    _
  %s4 = ssub.s32 1, %s2
  %s5 = scalar_select 0, %s4, %s2
  $region1: #{tpu_custom_call.1} parent=0
    #allocation2 [shape = 'u8[8192]{0}', space=vmem, size = 0x2000, scoped, tag = 'input window, operand 0, single buffered']
    #allocation3 [shape = 's32[1]{0}', space=sflag, size = 0x4, scoped, tag = 'scoped memory for tpu_custom_call.1']
    #allocation4 [shape = 's32[1]{0}', space=sflag, size = 0x4, scoped, tag = 'scoped memory for tpu_custom_call.1']
    #allocation5 [shape = 'u8[8192]{0}', space=vmem, size = 0x2000, scoped, tag = 'output window, operand 0, single buffered']
    %6 = vsyncpa [#allocation3], 0
    %7 = vsyncpa [#allocation4], 0
    // Predicated region
    $region2: #{tpu_custom_call.1} parent=1 // pred_check
      _
    $region3: #{tpu_custom_call.1} parent=1 // pred_check_branch
      %9 = sbr.rel (0) target = $region5
    $region4: #{tpu_custom_call.1} parent=1 // pred_region
      %s11 = ssub.s32 256, 256
      %12 = vsyncadd [#allocation3], %s11
      %s14 = sshll.u32 [#allocation2], 4
      %s15 = int_to_ptr.vmem [resolvable:$true] %s14
      %17 = dma.hbm_to_vmem [thread:$0]  %s0, 256, %s15, [#allocation3]
    $region5: #{tpu_custom_call.1} parent=1 // pred_fallthru
      _
    // Predicated region
    $region6: #{tpu_custom_call.1} parent=1 // pred_check
      _
    $region7: #{tpu_custom_call.1} parent=1 // pred_check_branch
      %19 = sbr.rel (0) target = $region9
    $region8: #{tpu_custom_call.1} parent=1 // pred_region
      %20 = dma.done [#allocation3], 256
    $region9: #{tpu_custom_call.1} parent=1 // pred_fallthru
      _
    %v21 = vld [vmem:[#allocation2] sm:$0xff]
    %v22 = vld [vmem:[#allocation2 + $0x8] sm:$0xff]
    %v23 = vadd.f32 %v21, %v21
    %v24 = vadd.f32 %v22, %v22
    %25 = vst [vmem:[#allocation5] sm:$0xff] %v23
    %26 = vst [vmem:[#allocation5 + $0x8] sm:$0xff] %v24
    // Predicated region
    $region10: #{tpu_custom_call.1} parent=1 // pred_check
      _
    $region11: #{tpu_custom_call.1} parent=1 // pred_check_branch
      %28 = sbr.rel (0) target = $region13
    $region12: #{tpu_custom_call.1} parent=1 // pred_region
      %s30 = ssub.s32 256, 256
      %31 = vsyncadd [#allocation4], %s30
      %s33 = sshll.u32 [#allocation5], 4
      %s34 = int_to_ptr.vmem [resolvable:$true] %s33
      %36 = dma.vmem_to_hbm [thread:$0]  %s34, 256, %s1, [#allocation4]
    $region13: #{tpu_custom_call.1} parent=1 // pred_fallthru
      _
    // Predicated region
    $region14: #{tpu_custom_call.1} parent=1 // pred_check
      _
    $region15: #{tpu_custom_call.1} parent=1 // pred_check_branch
      %38 = sbr.rel (0) target = $region17
    $region16: #{tpu_custom_call.1} parent=1 // pred_region
      %39 = dma.done [#allocation4], 256
    $region17: #{tpu_custom_call.1} parent=1 // pred_fallthru
      _
    %40 = vsyncpa [#allocation3], 1
    %41 = vsyncpa [#allocation4], 1

</llo_original>
